<compile_context>
chip_gen: v7x
topology: tpu7x:2x2x1
jax: 0.10.0
libtpu: 0.0.40
codegen_flags: <defaults>
</compile_context>

<pallas_src>
import functools

import jax
import jax.numpy as jnp
from jax.experimental import pallas as pl
from jax.experimental.pallas import tpu as pltpu


def cond_ln_kernel(x_ref, g_ref, h_ref, o_ref, *, eps, feat):
    # x_ref / o_ref: (1, TS, F); g_ref / h_ref: (1, 1, F)
    x = x_ref[0].astype(jnp.float32)                               # matches x.float()

    mean = jnp.sum(x, axis=-1, keepdims=True) * (1.0 / feat)       # (TS, 1)
    centered = x - mean                                            # (TS, F)

    # torch.std default is the unbiased estimator (divide by F - 1).
    # NOTE: feat == 1 would divide by zero -- same pathology as torch.std(unbiased=True).
    var = jnp.sum(centered * centered, axis=-1, keepdims=True) * (1.0 / (feat - 1))
    inv = 1.0 / (jnp.sqrt(var) + eps)                              # exact divide, (TS, 1) only

    # Fused scale/shift with pre-folded g = alpha*cond_scale, h = bias+cond_bias.
    o_ref[0] = (g_ref[0] * (centered * inv) + h_ref[0]).astype(o_ref.dtype)


def _choose_ts(B, S, F, itemsize=4, tile_budget_bytes=6 * 1024 * 1024,
               min_grid_steps=2):
    """Largest seq tile that divides S, is a multiple of 8 (f32 sublanes) and keeps
    a (TS, F) f32 tile under the budget, while leaving >= min_grid_steps total grid
    steps so both v7x TensorCores get work (harmless on single-TC v5e/v6e)."""
    if S % 8 != 0:
        return S  # block second-to-last dim must then equal the full dim
    candidates = [ts for ts in range(8, S + 1, 8)
                  if S % ts == 0 and ts * F * itemsize <= tile_budget_bytes]
    if not candidates:
        return 8
    best = max(candidates)
    if B * (S // best) < min_grid_steps:
        for ts in sorted(candidates, reverse=True):
            if B * (S // ts) >= min_grid_steps:
                return ts
    return best


def conditional_layer_norm(x, lang_embedding, w_scale, b_scale, w_bias, b_bias,
                           alpha, bias, eps=1e-6):
    B, S, F = x.shape
    out_dtype = jnp.float32   # module does x.float() with f32 params -> f32 output

    # ---- Hoisted conditional projections: ONE batched (B,E)x(E,2F) matmul in XLA ----
    w_cat = jnp.concatenate([w_scale, w_bias], axis=-1).astype(jnp.float32)   # (E, 2F)
    b_cat = jnp.concatenate([b_scale, b_bias], axis=-1).astype(jnp.float32)   # (2F,)
    proj = lang_embedding.astype(jnp.float32) @ w_cat + b_cat                 # (B, 2F)
    cond_scale, cond_bias = proj[:, :F], proj[:, F:]
    g = (alpha.astype(jnp.float32) * cond_scale)[:, None, :]                  # (B, 1, F)
    h = (bias.astype(jnp.float32) + cond_bias)[:, None, :]                    # (B, 1, F)

    TS = _choose_ts(B, S, F)
    grid = (B, S // TS)

    # VMEM: 2x double-buffered input tiles + 2x output tiles + ~2 full-tile f32
    # temps inside the body + g/h rows + slack.  Capped at 48 MiB so it also
    # fits v7x's 64 MiB physical VMEM.
    tile_bytes = TS * F * 4
    vmem_needed = 6 * tile_bytes + 8 * F * 4 + (1 << 20)
    vmem_limit = int(min(48 * 1024 * 1024, max(vmem_needed, 16 * 1024 * 1024)))

    in_bytes = x.size * jnp.dtype(x.dtype).itemsize + 2 * B * F * 4
    out_bytes = B * S * F * jnp.dtype(out_dtype).itemsize
    cost = pl.CostEstimate(
        flops=7 * B * S * F,          # center, square, reduce, scale, shift
        transcendentals=B * S,        # sqrt per row
        bytes_accessed=in_bytes + out_bytes,
    )

    kernel = functools.partial(cond_ln_kernel, eps=eps, feat=F)

    return pl.pallas_call(
        kernel,
        out_shape=jax.ShapeDtypeStruct((B, S, F), out_dtype),
        grid_spec=pltpu.PrefetchScalarGridSpec(
            num_scalar_prefetch=0,
            grid=grid,
            in_specs=[
                pl.BlockSpec((1, TS, F), lambda b, s: (b, s, 0)),   # x tile
                pl.BlockSpec((1, 1, F), lambda b, s: (b, 0, 0)),    # g (const over s)
                pl.BlockSpec((1, 1, F), lambda b, s: (b, 0, 0)),    # h (const over s)
            ],
            out_specs=pl.BlockSpec((1, TS, F), lambda b, s: (b, s, 0)),
        ),
        compiler_params=pltpu.CompilerParams(
            dimension_semantics=("parallel", "parallel"),
            vmem_limit_bytes=vmem_limit,
        ),
        cost_estimate=cost,
    )(x, g, h)


def reference(x, lang, w_scale, b_scale, w_bias, b_bias, alpha, bias, eps=1e-6):
    x = x.astype(jnp.float32)
    mean = jnp.mean(x, axis=-1, keepdims=True)
    std = jnp.std(x, axis=-1, keepdims=True, ddof=1)   # unbiased, like torch.std
    norm = (x - mean) / (std + eps)
    cs = (lang @ w_scale + b_scale)[:, None, :]
    cb = (lang @ w_bias + b_bias)[:, None, :]
    return alpha * cs * norm + bias + cb


if __name__ == "__main__":
    B, S, F, E = 2, 8, 32, 16   # batch, seq, features, embedding_size
    eps = 1e-6

    key = jax.random.PRNGKey(0)
    kx, kl, kws, kbs, kwb, kbb = jax.random.split(key, 6)

    x = jax.random.normal(kx, (B, S, F), dtype=jnp.float32)
    lang_embedding = jax.random.normal(kl, (B, E), dtype=jnp.float32)

    # Deterministic parameter init (nn.Linear-like uniform bound 1/sqrt(E)).
    bound = 1.0 / (E ** 0.5)
    w_scale = jax.random.uniform(kws, (E, F), jnp.float32, -bound, bound)
    b_scale = jax.random.uniform(kbs, (F,), jnp.float32, -bound, bound)
    w_bias = jax.random.uniform(kwb, (E, F), jnp.float32, -bound, bound)
    b_bias = jax.random.uniform(kbb, (F,), jnp.float32, -bound, bound)
    alpha = jnp.ones((F,), jnp.float32)   # self.alpha
    bias = jnp.zeros((F,), jnp.float32)   # self.bias

    out = conditional_layer_norm(x, lang_embedding, w_scale, b_scale,
                                 w_bias, b_bias, alpha, bias, eps)
    out = jax.block_until_ready(out)

    ref = reference(x, lang_embedding, w_scale, b_scale, w_bias, b_bias,
                    alpha, bias, eps)
    assert out.shape == (B, S, F) and out.dtype == jnp.float32
    assert jnp.allclose(out, ref, atol=1e-5, rtol=1e-5), "mismatch vs reference"
    print("KERNEL_OK")
</pallas_src>

<mosaic_0001>
module attributes {stable_mosaic.version = 11 : i64} {
  func.func @cond_ln_kernel(%arg0: i32, %arg1: i32, %arg2: memref<1x8x32xf32, #tpu.memory_space<vmem>>, %arg3: memref<1x1x32xf32, #tpu.memory_space<vmem>>, %arg4: memref<1x1x32xf32, #tpu.memory_space<vmem>>, %arg5: memref<1x8x32xf32, #tpu.memory_space<vmem>>) attributes {dimension_semantics = [#tpu.dimension_semantics<parallel>, #tpu.dimension_semantics<parallel>], iteration_bounds = array<i64: 2, 1>, scalar_prefetch = 0 : i64, scratch_operands = 0 : i64, tpu.core_type = #tpu.core_type<tc>, window_params = [{transform_indices = @transform_0, window_bounds = array<i64: 1, 8, 32>}, {transform_indices = @transform_1, window_bounds = array<i64: 1, 1, 32>}, {transform_indices = @transform_2, window_bounds = array<i64: 1, 1, 32>}, {transform_indices = @transform_3, window_bounds = array<i64: 1, 8, 32>}]} {
    %c0 = arith.constant 0 : index
    %c0_0 = arith.constant 0 : index
    %c0_1 = arith.constant 0 : index
    %0 = vector.load %arg2[%c0, %c0_0, %c0_1] : memref<1x8x32xf32, #tpu.memory_space<vmem>>, vector<1x8x32xf32>
    %1 = vector.shape_cast %0 : vector<1x8x32xf32> to vector<8x32xf32>
    %cst = arith.constant dense<0.000000e+00> : vector<8xf32>
    %2 = vector.multi_reduction <add>, %1, %cst [1] : vector<8x32xf32> to vector<8xf32>
    %3 = vector.shape_cast %2 : vector<8xf32> to vector<8x1xf32>
    %cst_2 = arith.constant 3.125000e-02 : f32
    %4 = vector.broadcast %cst_2 : f32 to vector<8x1xf32>
    %5 = arith.mulf %3, %4 : vector<8x1xf32>
    %6 = vector.broadcast %5 : vector<8x1xf32> to vector<8x32xf32>
    %7 = arith.subf %1, %6 : vector<8x32xf32>
    %8 = arith.mulf %7, %7 : vector<8x32xf32>
    %cst_3 = arith.constant dense<0.000000e+00> : vector<8xf32>
    %9 = vector.multi_reduction <add>, %8, %cst_3 [1] : vector<8x32xf32> to vector<8xf32>
    %10 = vector.shape_cast %9 : vector<8xf32> to vector<8x1xf32>
    %cst_4 = arith.constant 0.0322580636 : f32
    %11 = vector.broadcast %cst_4 : f32 to vector<8x1xf32>
    %12 = arith.mulf %10, %11 : vector<8x1xf32>
    %13 = math.sqrt %12 : vector<8x1xf32>
    %cst_5 = arith.constant 9.99999997E-7 : f32
    %14 = vector.broadcast %cst_5 : f32 to vector<8x1xf32>
    %15 = arith.addf %13, %14 : vector<8x1xf32>
    %cst_6 = arith.constant 1.000000e+00 : f32
    %16 = vector.broadcast %cst_6 : f32 to vector<8x1xf32>
    %17 = arith.divf %16, %15 : vector<8x1xf32>
    %c0_7 = arith.constant 0 : index
    %c0_8 = arith.constant 0 : index
    %c0_9 = arith.constant 0 : index
    %18 = vector.load %arg3[%c0_7, %c0_8, %c0_9] : memref<1x1x32xf32, #tpu.memory_space<vmem>>, vector<1x1x32xf32>
    %19 = vector.shape_cast %18 : vector<1x1x32xf32> to vector<1x32xf32>
    %20 = vector.broadcast %17 : vector<8x1xf32> to vector<8x32xf32>
    %21 = arith.mulf %7, %20 : vector<8x32xf32>
    %22 = vector.broadcast %19 : vector<1x32xf32> to vector<8x32xf32>
    %23 = arith.mulf %22, %21 : vector<8x32xf32>
    %c0_10 = arith.constant 0 : index
    %c0_11 = arith.constant 0 : index
    %c0_12 = arith.constant 0 : index
    %24 = vector.load %arg4[%c0_10, %c0_11, %c0_12] : memref<1x1x32xf32, #tpu.memory_space<vmem>>, vector<1x1x32xf32>
    %25 = vector.shape_cast %24 : vector<1x1x32xf32> to vector<1x32xf32>
    %26 = vector.broadcast %25 : vector<1x32xf32> to vector<8x32xf32>
    %27 = arith.addf %23, %26 : vector<8x32xf32>
    %c0_13 = arith.constant 0 : index
    %c0_14 = arith.constant 0 : index
    %c0_15 = arith.constant 0 : index
    %28 = vector.load %arg5[%c0_13, %c0_14, %c0_15] : memref<1x8x32xf32, #tpu.memory_space<vmem>>, vector<1x8x32xf32>
    %29 = vector.shape_cast %28 : vector<1x8x32xf32> to vector<8x32xf32>
    %30 = vector.shape_cast %27 : vector<8x32xf32> to vector<1x8x32xf32>
    tpu.vector_store %arg5[%c0_13, %c0_14, %c0_15], %30 {strides = array<i32>} : memref<1x8x32xf32, #tpu.memory_space<vmem>>, vector<1x8x32xf32>,
    return
  }
  func.func @transform_0(%arg0: i32, %arg1: i32) -> (i32, i32, i32) {
    %c0_i32 = arith.constant 0 : i32
    %c0_i32_0 = arith.constant 0 : i32
    return %arg0, %arg1, %c0_i32 : i32, i32, i32
  }
  func.func @transform_1(%arg0: i32, %arg1: i32) -> (i32, i32, i32) {
    %c0_i32 = arith.constant 0 : i32
    %c0_i32_0 = arith.constant 0 : i32
    %c0_i32_1 = arith.constant 0 : i32
    return %arg0, %c0_i32, %c0_i32_0 : i32, i32, i32
  }
  func.func @transform_2(%arg0: i32, %arg1: i32) -> (i32, i32, i32) {
    %c0_i32 = arith.constant 0 : i32
    %c0_i32_0 = arith.constant 0 : i32
    %c0_i32_1 = arith.constant 0 : i32
    return %arg0, %c0_i32, %c0_i32_0 : i32, i32, i32
  }
  func.func @transform_3(%arg0: i32, %arg1: i32) -> (i32, i32, i32) {
    %c0_i32 = arith.constant 0 : i32
    %c0_i32_0 = arith.constant 0 : i32
    return %arg0, %arg1, %c0_i32 : i32, i32, i32
  }
}

</mosaic_0001>

<llo_original>
// kernel: tpu_custom_call.1
$region0: #{tpu_custom_call.1}
  #allocation0 [shape = 'u32[]', space=smem, size = 0x4, offset = 0x4, fixed_abs, tag = 'smem constant byte address 0x4 - core index']
  #allocation1 [shape = 'u32[144,128]{1,0:T(1,128)}', space=vmem, size = 0x12000, scoped, tag = 'internal scratch']
  %s0 = inlined_call_operand.hbm [shape: f32[2,8,32], index: 0, kind: input, shape index: {}]
  %s1 = inlined_call_operand.vmem [shape: f32[2,1,32], index: 1, kind: input, shape index: {}]
  %s2 = inlined_call_operand.vmem [shape: f32[2,1,32], index: 2, kind: input, shape index: {}]
  %s3 = inlined_call_operand.hbm [shape: f32[2,8,32], index: 3, kind: output, shape index: {}]
  %s4 = sld [smem:[#allocation0]]
  $region49: #{tpu_custom_call.1} parent=0
    _
  %s6 = ssub.s32 1, %s4
  %s7 = scalar_select 0, %s6, %s4
  $region1: #{tpu_custom_call.1} parent=0
    #allocation2 [shape = 'u8[8192]{0}', space=vmem, size = 0x2000, scoped, tag = 'input window, operand 0']
    #allocation3 [shape = 's32[2]{0}', space=sflag, size = 0x8, scoped, tag = 'scoped memory for tpu_custom_call.1']
    #allocation4 [shape = 's32[2]{0}', space=sflag, size = 0x8, scoped, tag = 'scoped memory for tpu_custom_call.1']
    #allocation5 [shape = 'u8[8192]{0}', space=vmem, size = 0x2000, scoped, tag = 'output window, operand 0']
    %8 = vsyncpa [#allocation3], 0
    %s9 = scalar_lea.sflag [#allocation3], 1
    %10 = vsyncpa %s9, 0
    %11 = vsyncpa [#allocation4], 0
    %s12 = scalar_lea.sflag [#allocation4], 1
    %13 = vsyncpa %s12, 0
    loop: start=0, step=1, limit=4
    $region2: #{tpu_custom_call.1} parent=1 // loop_pre_header
      _
    $region3: #{tpu_custom_call.1} parent=1 // loop_header
      %s15 = sphi 0, %s19
      %p16 = scmp.ge.s32.totalorder %s15, 4
      %s22 = sphi 0, %s34
      %s23 = sphi 0, %s30
      %s24 = sphi 0, %s22
      %s25 = sphi 0, %s23
      %s26 = sphi 0, %s24
      %s27 = sphi 0, %s25
      %s39 = sphi 0, %s41
      %s42 = sphi 0, %s39
      %s43 = sphi 0, %s42
      %s59 = sphi 0, %s43
      %s65 = sphi 0, %s67
      %s68 = sphi 0, %s65
      %s69 = sphi 0, %s68
      %s85 = sphi 0, %s69
      %s91 = sphi 0, %s93
      %s94 = sphi 0, %s91
      %s95 = sphi 0, %s94
      %s111 = sphi 0, %s95
      %s119 = sphi 0, %s121
      %s122 = sphi 0, %s119
      %s123 = sphi 0, %s122
      %s139 = sphi 0, %s123
    $region4: #{tpu_custom_call.1} parent=1 // loop_header_branch
      %18 = sbr.rel (%p16) target = $region8
    $region5: #{tpu_custom_call.1} parent=1 // loop_body
      %s20 = ssub.s32 %s15, 1
      %s21 = ssub.s32 %s15, 2
      %s28 = sadd.s32 1, %s23
      %p29 = scmp.ge.s32.totalorder %s28, 1
      %s30 = scalar_select %p29, 0, %s28
      %s31 = sadd.s32 1, %s22
      %s32 = scalar_select %p29, %s31, %s22
      %p33 = scmp.ge.s32.totalorder %s32, 2
      %s34 = scalar_select %p33, 0, %s32
      %s35 = ssub.s32 %s22, %s34
      %s36 = ssub.s32 %s23, %s30
      %s37 = sor.u32 %s35, %s36
      %p38 = scmp.eq.s32.totalorder %s37, 0
      %s40 = sadd.s32 %s39, 1
      %s41 = scalar_select %p38, %s39, %s40
      %p44 = pneg %p38
      %p45 = scmp.eq.s32.totalorder %s15, 1
      %p46 = por %p44, %p45
      %p47 = scmp.ne.s32.totalorder %s39, %s42
      %p48 = scmp.eq.s32.totalorder %s15, 0
      %p49 = por %p47, %p48
      %p50 = scmp.ne.s32.totalorder %s39, %s42
      %p51 = scmp.eq.s32.totalorder %s20, 1
      %p52 = por %p50, %p51
      %p53 = scmp.ne.s32.totalorder %s42, %s43
      %p54 = scmp.eq.s32.totalorder %s20, 0
      %p55 = por %p53, %p54
      %p56 = scmp.ne.s32.totalorder %s42, %s43
      %p57 = scmp.eq.s32.totalorder %s21, 1
      %p58 = por %p56, %p57
      %p60 = scmp.ne.s32.totalorder %s43, %s59
      %p61 = scmp.eq.s32.totalorder %s21, 0
      %p62 = por %p60, %p61
      %s63 = ssub.s32 %s22, %s34
      %p64 = scmp.eq.s32.totalorder %s63, 0
      %s66 = sadd.s32 %s65, 1
      %s67 = scalar_select %p64, %s65, %s66
      %p70 = pneg %p64
      %p71 = scmp.eq.s32.totalorder %s15, 1
      %p72 = por %p70, %p71
      %p73 = scmp.ne.s32.totalorder %s65, %s68
      %p74 = scmp.eq.s32.totalorder %s15, 0
      %p75 = por %p73, %p74
      %p76 = scmp.ne.s32.totalorder %s65, %s68
      %p77 = scmp.eq.s32.totalorder %s20, 1
      %p78 = por %p76, %p77
      %p79 = scmp.ne.s32.totalorder %s68, %s69
      %p80 = scmp.eq.s32.totalorder %s20, 0
      %p81 = por %p79, %p80
      %p82 = scmp.ne.s32.totalorder %s68, %s69
      %p83 = scmp.eq.s32.totalorder %s21, 1
      %p84 = por %p82, %p83
      %p86 = scmp.ne.s32.totalorder %s69, %s85
      %p87 = scmp.eq.s32.totalorder %s21, 0
      %p88 = por %p86, %p87
      %s89 = ssub.s32 %s22, %s34
      %p90 = scmp.eq.s32.totalorder %s89, 0
      %s92 = sadd.s32 %s91, 1
      %s93 = scalar_select %p90, %s91, %s92
      %p96 = pneg %p90
      %p97 = scmp.eq.s32.totalorder %s15, 1
      %p98 = por %p96, %p97
      %p99 = scmp.ne.s32.totalorder %s91, %s94
      %p100 = scmp.eq.s32.totalorder %s15, 0
      %p101 = por %p99, %p100
      %p102 = scmp.ne.s32.totalorder %s91, %s94
      %p103 = scmp.eq.s32.totalorder %s20, 1
      %p104 = por %p102, %p103
      %p105 = scmp.ne.s32.totalorder %s94, %s95
      %p106 = scmp.eq.s32.totalorder %s20, 0
      %p107 = por %p105, %p106
      %p108 = scmp.ne.s32.totalorder %s94, %s95
      %p109 = scmp.eq.s32.totalorder %s21, 1
      %p110 = por %p108, %p109
      %p112 = scmp.ne.s32.totalorder %s95, %s111
      %p113 = scmp.eq.s32.totalorder %s21, 0
      %p114 = por %p112, %p113
      %s115 = ssub.s32 %s22, %s34
      %s116 = ssub.s32 %s23, %s30
      %s117 = sor.u32 %s115, %s116
      %p118 = scmp.eq.s32.totalorder %s117, 0
      %s120 = sadd.s32 %s119, 1
      %s121 = scalar_select %p118, %s119, %s120
      %p124 = pneg %p118
      %p125 = scmp.eq.s32.totalorder %s15, 1
      %p126 = por %p124, %p125
      %p127 = scmp.ne.s32.totalorder %s119, %s122
      %p128 = scmp.eq.s32.totalorder %s15, 0
      %p129 = por %p127, %p128
      %p130 = scmp.ne.s32.totalorder %s119, %s122
      %p131 = scmp.eq.s32.totalorder %s20, 1
      %p132 = por %p130, %p131
      %p133 = scmp.ne.s32.totalorder %s122, %s123
      %p134 = scmp.eq.s32.totalorder %s20, 0
      %p135 = por %p133, %p134
      %p136 = scmp.ne.s32.totalorder %s122, %s123
      %p137 = scmp.eq.s32.totalorder %s21, 1
      %p138 = por %p136, %p137
      %p140 = scmp.ne.s32.totalorder %s123, %s139
      %p141 = scmp.eq.s32.totalorder %s21, 0
      %p142 = por %p140, %p141
      %p143 = scmp.le.s32.totalorder 1, %s15
      %p144 = scmp.lt.s32.totalorder %s15, 3
      %p145 = pnand %p143, %p144
      %p146 = pneg %p145
      // Predicated region
      $region9: #{tpu_custom_call.1} parent=5 // pred_check
        _
      $region10: #{tpu_custom_call.1} parent=5 // pred_check_branch
        %148 = sbr.rel (%p145) target = $region12
      $region11: #{tpu_custom_call.1} parent=5 // pred_region
        %s149 = ssub.s32 %s15, 1
      $region12: #{tpu_custom_call.1} parent=5 // pred_fallthru
        _
      %p150 = scmp.lt.s32.totalorder %s15, 2
      // Predicated region
      $region13: #{tpu_custom_call.1} parent=5 // pred_check
        %p151 = pneg %p150
      $region14: #{tpu_custom_call.1} parent=5 // pred_check_branch
        %153 = sbr.rel (%p151) target = $region16
      $region15: #{tpu_custom_call.1} parent=5 // pred_region
        // Predicated region
        $region17: #{tpu_custom_call.1} parent=15 // pred_check
          %p154 = pneg %p49
        $region18: #{tpu_custom_call.1} parent=15 // pred_check_branch
          %156 = sbr.rel (%p154) target = $region20
        $region19: #{tpu_custom_call.1} parent=15 // pred_region
          %s157 = sand.u32 %s39, 1
          %s158 = scalar_lea.sflag [#allocation3], %s157
          %s159 = sand.u32 %s39, 1
          %s160 = smul.addr %s159, 8
          %s161 = scalar_lea.vmem [#allocation2], %s160
          %s163 = ssub.s32 128, 128
          %164 = vsyncadd %s158, %s163
          %s165 = sadd.s32 %s23, %s22
          %s166 = smul.addr %s165, 128
          %s167 = scalar_lea.hbm %s0, %s166
          %s169 = sshll.u32 %s161, 4
          %s170 = int_to_ptr.vmem [resolvable:$true] %s169
          %172 = dma.hbm_to_vmem [thread:$0]  %s167, 128, %s170, %s158
        $region20: #{tpu_custom_call.1} parent=15 // pred_fallthru
          _
        // Predicated region
        $region21: #{tpu_custom_call.1} parent=15 // pred_check
          %p173 = pneg %p75
        $region22: #{tpu_custom_call.1} parent=15 // pred_check_branch
          %175 = sbr.rel (%p173) target = $region24
        $region23: #{tpu_custom_call.1} parent=15 // pred_region
          %p176 = scmp.lt.s32.totalorder %s22, 1
          %s177 = scalar_select %p176, %s22, 1
          %s178 = scalar_lea.vmem %s1, %s177
        $region24: #{tpu_custom_call.1} parent=15 // pred_fallthru
          _
        // Predicated region
        $region25: #{tpu_custom_call.1} parent=15 // pred_check
          %p179 = pneg %p101
        $region26: #{tpu_custom_call.1} parent=15 // pred_check_branch
          %181 = sbr.rel (%p179) target = $region28
        $region27: #{tpu_custom_call.1} parent=15 // pred_region
          %p182 = scmp.lt.s32.totalorder %s22, 1
          %s183 = scalar_select %p182, %s22, 1
          %s184 = scalar_lea.vmem %s2, %s183
        $region28: #{tpu_custom_call.1} parent=15 // pred_fallthru
          _
      $region16: #{tpu_custom_call.1} parent=5 // pred_fallthru
        _
      %p185 = scmp.le.s32.totalorder 1, %s15
      %p186 = scmp.lt.s32.totalorder %s15, 3
      %p187 = pnand %p185, %p186
      %p188 = pneg %p187
      // Predicated region
      $region29: #{tpu_custom_call.1} parent=5 // pred_check
        _
      $region30: #{tpu_custom_call.1} parent=5 // pred_check_branch
        %190 = sbr.rel (%p187) target = $region32
      $region31: #{tpu_custom_call.1} parent=5 // pred_region
        %s191 = ssub.s32 %s15, 1
        %s192 = sand.u32 %s42, 1
        %s193 = scalar_lea.sflag [#allocation3], %s192
        %s194 = sand.u32 %s42, 1
        %s195 = smul.addr %s194, 8
        %s196 = scalar_lea.vmem [#allocation2], %s195
        // Predicated region
        $region33: #{tpu_custom_call.1} parent=31 // pred_check
          %p197 = pneg %p55
        $region34: #{tpu_custom_call.1} parent=31 // pred_check_branch
          %199 = sbr.rel (%p197) target = $region36
        $region35: #{tpu_custom_call.1} parent=31 // pred_region
          %200 = dma.done %s193, 128
        $region36: #{tpu_custom_call.1} parent=31 // pred_fallthru
          _
        %s201 = sand.u32 %s42, 1
        %s202 = scalar_lea.sflag [#allocation3], %s201
        %s203 = sand.u32 %s42, 1
        %s204 = smul.addr %s203, 8
        %s205 = scalar_lea.vmem [#allocation2], %s204
        %p206 = pneg %p55
        %p207 = pneg %p52
        %p208 = scmp.lt.s32.totalorder %s24, 1
        %s209 = scalar_select %p208, %s24, 1
        %s210 = scalar_lea.vmem %s1, %s209
        %p211 = pneg %p81
        %p212 = pneg %p78
        %p213 = scmp.lt.s32.totalorder %s24, 1
        %s214 = scalar_select %p213, %s24, 1
        %s215 = scalar_lea.vmem %s2, %s214
        %p216 = pneg %p107
        %p217 = pneg %p104
        %p218 = pneg %p135
        %p219 = pneg %p132
        %s220 = sand.u32 %s122, 1
        %s221 = scalar_lea.sflag [#allocation4], %s220
        %s222 = sand.u32 %s122, 1
        %s223 = smul.addr %s222, 8
        %s224 = scalar_lea.vmem [#allocation5], %s223
        %p225 = scmp.lt.s32.totalorder %s24, 1
        %s226 = scalar_select %p225, %s24, 1
        %s227 = scalar_lea.vmem %s1, %s226
        %p228 = scmp.lt.s32.totalorder %s24, 1
        %s229 = scalar_select %p228, %s24, 1
        %s230 = scalar_lea.vmem %s2, %s229
        %v231 = vld [vmem:[%s196] sm:$0xff]
        %vm232 = vcmask 261120
        %v233 = vsel %vm232, %v231, 0.0
        %234 = vadd.xlane.f32.xlu0 %v233
        %v235 = vpop.xlane.xlu0 %234
        %v236 = vmul.f32 %v235, 0.03125
        %v237 = vsub.f32 %v231, %v236
        %v238 = vmul.f32 %v237, %v237
        %v239 = vsel %vm232, %v238, 0.0
        %240 = vadd.xlane.f32.xlu0 %v239
        %v241 = vpop.xlane.xlu0 %240
        %v242 = vmul.f32 %v241, 0.032258064
        %v243 = vrsqrt.pop %v242
        %v244 = vmul.f32 %v242, %v243
        %vm245 = vcmp.eq.f32.partialorder %v242, inf
        %v246 = vsel %vm245, %v242, %v244
        %vm247 = vcmp.eq.f32.partialorder %v242, 0.0
        %v248 = vand.u32 %v242, 2147483648
        %v249 = vsel %vm247, %v248, %v246
        %v250 = vadd.f32 %v249, 1e-06
        %v251 = vrcp.pop %v250
        %v252 = vmul.f32 1.0, %v251
        %v253 = vld [vmem:[%s227] sm:$0x1]
        %v254 = vmul.f32 %v237, %v252
        %v256 = vlaneseq
        %v257 = vshrl.u32 %v256, 7
        %v258 = vsub.s32 0, %v257
        %v259 = vrot.slane %v253, %v258
        %v261 = vmul.f32 %v259, %v254
        %v262 = vld [vmem:[%s230] sm:$0x1]
        %v264 = vlaneseq
        %v265 = vshrl.u32 %v264, 7
        %v266 = vsub.s32 0, %v265
        %v267 = vrot.slane %v262, %v266
        %v269 = vadd.f32 %v261, %v267
        %270 = vst.msk [vmem:[%s224] sm:$0xff] %vm232, %v269
        %s271 = sand.u32 %s122, 1
        %s272 = scalar_lea.sflag [#allocation4], %s271
        %s273 = sand.u32 %s122, 1
        %s274 = smul.addr %s273, 8
        %s275 = scalar_lea.vmem [#allocation5], %s274
        // Predicated region
        $region37: #{tpu_custom_call.1} parent=31 // pred_check
          %p276 = pneg %p132
        $region38: #{tpu_custom_call.1} parent=31 // pred_check_branch
          %278 = sbr.rel (%p276) target = $region40
        $region39: #{tpu_custom_call.1} parent=31 // pred_region
          %s280 = ssub.s32 128, 128
          %281 = vsyncadd %s272, %s280
          %s282 = sadd.s32 %s25, %s24
          %s283 = smul.addr %s282, 128
          %s284 = scalar_lea.hbm %s3, %s283
          %s286 = sshll.u32 %s275, 4
          %s287 = int_to_ptr.vmem [resolvable:$true] %s286
          %289 = dma.vmem_to_hbm [thread:$0]  %s287, 128, %s284, %s272
        $region40: #{tpu_custom_call.1} parent=31 // pred_fallthru
          _
      $region32: #{tpu_custom_call.1} parent=5 // pred_fallthru
        _
      %p290 = scmp.le.s32.totalorder 2, %s15
      // Predicated region
      $region41: #{tpu_custom_call.1} parent=5 // pred_check
        %p291 = pneg %p290
      $region42: #{tpu_custom_call.1} parent=5 // pred_check_branch
        %293 = sbr.rel (%p291) target = $region44
      $region43: #{tpu_custom_call.1} parent=5 // pred_region
        %s294 = ssub.s32 %s15, 2
        // Predicated region
        $region45: #{tpu_custom_call.1} parent=43 // pred_check
          %p295 = pneg %p138
        $region46: #{tpu_custom_call.1} parent=43 // pred_check_branch
          %297 = sbr.rel (%p295) target = $region48
        $region47: #{tpu_custom_call.1} parent=43 // pred_region
          %s298 = sand.u32 %s123, 1
          %s299 = scalar_lea.sflag [#allocation4], %s298
          %s300 = sand.u32 %s123, 1
          %s301 = smul.addr %s300, 8
          %s302 = scalar_lea.vmem [#allocation5], %s301
          %303 = dma.done %s299, 128
        $region48: #{tpu_custom_call.1} parent=43 // pred_fallthru
          _
      $region44: #{tpu_custom_call.1} parent=5 // pred_fallthru
        _
    $region6: #{tpu_custom_call.1} parent=1 // loop_footer
      %s19 = sadd.s32 1, %s15
    $region7: #{tpu_custom_call.1} parent=1 // loop_footer_branch
      %14 = sbr.rel target = $region3
    $region8: #{tpu_custom_call.1} parent=1 // loop_exit
      _
    %304 = vsyncpa [#allocation3], 1
    %s305 = scalar_lea.sflag [#allocation3], 1
    %306 = vsyncpa %s305, 1
    %307 = vsyncpa [#allocation4], 1
    %s308 = scalar_lea.sflag [#allocation4], 1
    %309 = vsyncpa %s308, 1

</llo_original>
